<compile_context>
chip_gen: v7x
topology: tpu7x:2x2x1
jax: 0.10.0
libtpu: 0.0.40
codegen_flags: <defaults>
</compile_context>

<pallas_src>
import functools

import jax
import jax.numpy as jnp
import numpy as np
from jax.experimental import pallas as pl
from jax.experimental.pallas import tpu as pltpu

LN_EPS = 1e-5


def _predictor_kernel(x_ref, w1_ref, b1_ref, g1_ref, be1_ref,
                      w2_ref, b2_ref, wl2_ref, c_ref,
                      out_ref, hpad_ref, *, seq_len, left, pad):
    Bt, Tpad, C = x_ref.shape
    K = w1_ref.shape[0]
    T = seq_len
    R = Bt * T                     # rows fed to the MXU
    off = left - pad               # time offset of the first conv tap

    def conv_relu(src_ref, w_ref, b_ref):
        # K accumulated (R, C) @ (C, C) MXU matmuls over time-shifted views
        # (no im2col materialization).  f32 accumulation; v7x's MRB even
        # accumulates in place.
        h = jnp.dot(src_ref[:, off:off + T, :].reshape(R, C), w_ref[0],
                    preferred_element_type=jnp.float32)
        for tap in range(1, K):
            h = h + jnp.dot(
                src_ref[:, off + tap:off + tap + T, :].reshape(R, C),
                w_ref[tap], preferred_element_type=jnp.float32)
        h = h + b_ref[0][None, :]
        return jnp.maximum(h, 0.0)                     # ReLU, f32

    def ln_normalize(h):
        # One-pass LayerNorm statistics over channels; clamp variance >= 0
        # (post-ReLU activations can have large means).
        mu = jnp.mean(h, axis=-1, keepdims=True)
        ms = jnp.mean(h * h, axis=-1, keepdims=True)
        var = jnp.maximum(ms - mu * mu, 0.0)
        return (h - mu) * jax.lax.rsqrt(var + LN_EPS)

    # --- block 1: conv1 -> relu -> LN1 (dropout1 = identity, eval mode) ---
    h1 = ln_normalize(conv_relu(x_ref, w1_ref, b1_ref))
    h1 = h1 * g1_ref[0][None, :] + be1_ref[0][None, :]

    # Re-pad in time through the persistent bf16 VMEM scratch.  Halo rows are
    # re-zeroed every grid step (cheap; safe under megacore sharding), and all
    # writes start on 8-row sublane boundaries (left is a multiple of 8).
    if left > 0:
        hpad_ref[:, 0:left, :] = jnp.zeros((Bt, left, C), hpad_ref.dtype)
    right = Tpad - (left + T)
    if right > 0:
        hpad_ref[:, left + T:Tpad, :] = jnp.zeros((Bt, right, C),
                                                  hpad_ref.dtype)
    hpad_ref[:, left:left + T, :] = h1.reshape(Bt, T, C).astype(hpad_ref.dtype)

    # --- block 2: conv2 -> relu -> LN2 stats only (gamma/beta folded into the
    # final linear on the host); dropout2 = identity (eval mode).
    n2 = ln_normalize(conv_relu(hpad_ref, w2_ref, b2_ref))

    # --- final linear C -> 1 as a VPU multiply + lane reduce; the output slab
    # is lane-dense (T on the lane axis).
    y = jnp.sum(n2.reshape(Bt, T, C) * wl2_ref[0][None, None, :], axis=-1)
    y = y + c_ref[0, 0]
    out_ref[...] = y.reshape(Bt, 1, T).astype(out_ref.dtype)


def _vmem_config():
    """(per-step VMEM budget, vmem_limit_bytes) by TPU generation."""
    cap = None
    try:
        cap = pltpu.get_tpu_info().vmem_capacity_bytes
    except Exception:
        cap = None
    if cap is not None and cap >= 100 * 1024 * 1024:
        # v5e / v6e: 128 MiB physical VMEM -> use bigger tiles.
        return 32 * 1024 * 1024, 96 * 1024 * 1024
    # v7x (64 MiB per TensorCore) or unknown -> conservative.
    return 16 * 1024 * 1024, 48 * 1024 * 1024


def _pick_block_batch(B, T, C, Tpad, budget):
    """Largest divisor of B whose per-step VMEM footprint fits `budget`
    while keeping >= 2 grid steps when B > 1 (so both v7x TensorCores get
    work and input/output DMAs have something to overlap against)."""
    # Per-batch-element bytes: double-buffered bf16 x block, single-buffered
    # bf16 hpad scratch, ~6 live f32 (T, C) temps (conv acc / LN stats / h1).
    per_b = (2 * Tpad * C * 2) * 2 + Tpad * C * 2 + 6 * T * C * 4
    bt = 1
    for d in range(1, B + 1):
        if B % d != 0:
            continue
        if d * per_b > budget:
            break
        if B // d < 2 and B > 1:
            break
        bt = d
    return bt


def predictor_forward(x, params, kernel_size):
    """x: (B, T, C) float32 -> (B, T) float32."""
    B, T, C = x.shape
    K = kernel_size
    pad = (K - 1) // 2

    (w1, b1, g1, be1, w2, b2, g2, be2, wl, bl) = params

    # Sublane-aligned halo: left halo rounded up to 8 rows, total padded length
    # rounded up to a multiple of 8.  The right halo covers all K-1 taps so no
    # tap read ever goes out of bounds.
    if K > 1:
        left = ((pad + 7) // 8) * 8
        need = left + T + max(K - 1 - pad, 0)
        Tpad = ((need + 7) // 8) * 8
    else:
        left, Tpad = 0, T

    # Cast matmul operands to bf16 at the boundary; fold LN2's affine into the
    # final linear (wl2 = g2 * wl, c = sum(be2 * wl) + bl).
    x_padded = jnp.pad(x, ((0, 0), (left, Tpad - left - T), (0, 0))
                       ).astype(jnp.bfloat16)
    w1_k = w1.astype(jnp.bfloat16)                            # (K, C, C)
    w2_k = w2.astype(jnp.bfloat16)                            # (K, C, C)
    wl2 = (g2 * wl).astype(jnp.float32)                       # (1, C)
    cl = (jnp.sum(be2 * wl, axis=-1, keepdims=True) + bl
          ).astype(jnp.float32)                               # (1, 1)

    budget, vmem_limit = _vmem_config()
    bt = _pick_block_batch(B, T, C, Tpad, budget)
    grid = (B // bt,)

    kernel = functools.partial(_predictor_kernel, seq_len=T, left=left, pad=pad)

    def full(shape):
        n = len(shape)
        return pl.BlockSpec(shape, lambda i, n=n: (0,) * n)

    out = pl.pallas_call(
        kernel,
        out_shape=jax.ShapeDtypeStruct((B, 1, T), jnp.float32),
        grid_spec=pltpu.PrefetchScalarGridSpec(
            num_scalar_prefetch=0,
            grid=grid,
            in_specs=[
                pl.BlockSpec((bt, Tpad, C), lambda i: (i, 0, 0)),  # x (bf16)
                full((K, C, C)),    # conv1 weight (bf16)
                full((1, C)),       # conv1 bias   (f32)
                full((1, C)),       # ln1 gamma
                full((1, C)),       # ln1 beta
                full((K, C, C)),    # conv2 weight (bf16)
                full((1, C)),       # conv2 bias
                full((1, C)),       # linear weight with LN2 gamma folded in
                full((1, 1)),       # linear bias with LN2 beta folded in
            ],
            out_specs=pl.BlockSpec((bt, 1, T), lambda i: (i, 0, 0)),
            scratch_shapes=[pltpu.VMEM((bt, Tpad, C), jnp.bfloat16)],
        ),
        compiler_params=pltpu.CompilerParams(
            dimension_semantics=("parallel",),
            vmem_limit_bytes=vmem_limit,
        ),
    )(x_padded, w1_k, b1, g1, be1, w2_k, b2, wl2, cl)

    return out[:, 0, :]  # (B, T)


def make_params(key, input_size, kernel_size):
    """Deterministic synthetic parameters matching the PyTorch module shapes.

    Conv weights are stored as (K, C_in, C_out) (PyTorch Conv1d weight is
    (C_out, C_in, K)); linear weight is stored as (1, C) (same as PyTorch)."""
    C, K = input_size, kernel_size
    ks = jax.random.split(key, 8)
    w1 = 0.1 * jax.random.normal(ks[0], (K, C, C), jnp.float32)
    b1 = 0.1 * jax.random.normal(ks[1], (1, C), jnp.float32)
    g1 = 1.0 + 0.1 * jax.random.normal(ks[2], (1, C), jnp.float32)
    be1 = 0.1 * jax.random.normal(ks[3], (1, C), jnp.float32)
    w2 = 0.1 * jax.random.normal(ks[4], (K, C, C), jnp.float32)
    b2 = 0.1 * jax.random.normal(ks[5], (1, C), jnp.float32)
    g2 = 1.0 + 0.1 * jax.random.normal(ks[6], (1, C), jnp.float32)
    be2 = 0.1 * jax.random.normal(ks[7], (1, C), jnp.float32)
    kl = jax.random.split(ks[0], 2)
    wl = 0.1 * jax.random.normal(kl[0], (1, C), jnp.float32)
    bl = 0.1 * jax.random.normal(kl[1], (1, 1), jnp.float32)
    return (w1, b1, g1, be1, w2, b2, g2, be2, wl, bl)


def reference_forward(x, params, kernel_size):
    """Pure-JAX f32 reference of the PyTorch forward (eval mode)."""
    (w1, b1, g1, be1, w2, b2, g2, be2, wl, bl) = params
    B, T, C = x.shape
    K = kernel_size
    pad = (K - 1) // 2

    def conv(h, w, b):
        hp = jnp.pad(h, ((0, 0), (pad, pad), (0, 0)))
        out = jnp.zeros((B, T, C), jnp.float32) + b[0]
        for tap in range(K):
            out = out + jnp.einsum("bti,io->bto", hp[:, tap:tap + T, :], w[tap])
        return out

    def ln(h, g, be):
        mu = jnp.mean(h, axis=-1, keepdims=True)
        var = jnp.mean((h - mu) ** 2, axis=-1, keepdims=True)
        return (h - mu) / jnp.sqrt(var + LN_EPS) * g[0] + be[0]

    h = ln(jnp.maximum(conv(x, w1, b1), 0.0), g1, be1)
    h = ln(jnp.maximum(conv(h, w2, b2), 0.0), g2, be2)
    return jnp.einsum("btc,c->bt", h, wl[0]) + bl[0, 0]


if __name__ == "__main__":
    B, T, C, K = 2, 16, 32, 3          # batch, seq, input_size, kernel_size
    key = jax.random.PRNGKey(0)
    k_x, k_p = jax.random.split(key)
    x = jax.random.normal(k_x, (B, T, C), jnp.float32)
    params = make_params(k_p, C, K)

    fwd = jax.jit(functools.partial(predictor_forward, kernel_size=K))
    y = fwd(x, params)
    jax.block_until_ready(y)

    y_ref = reference_forward(x, params, K)
    assert y.shape == (B, T), y.shape
    # Looser tolerance: kernel uses bf16 matmul operands (f32 accumulation) and
    # a bf16 inter-block scratch; the reference is pure f32; two chained convs
    # plus LayerNorm amplify bf16 quantization noise.
    np.testing.assert_allclose(np.asarray(y), np.asarray(y_ref),
                               rtol=2e-2, atol=5e-2)
    print("KERNEL_OK")
</pallas_src>

<mosaic_0001>
module attributes {stable_mosaic.version = 11 : i64} {
  func.func @_predictor_kernel(%arg0: i32, %arg1: memref<1x32x32xbf16, #tpu.memory_space<vmem>>, %arg2: memref<3x32x32xbf16, #tpu.memory_space<vmem>>, %arg3: memref<1x32xf32, #tpu.memory_space<vmem>>, %arg4: memref<1x32xf32, #tpu.memory_space<vmem>>, %arg5: memref<1x32xf32, #tpu.memory_space<vmem>>, %arg6: memref<3x32x32xbf16, #tpu.memory_space<vmem>>, %arg7: memref<1x32xf32, #tpu.memory_space<vmem>>, %arg8: memref<1x32xf32, #tpu.memory_space<vmem>>, %arg9: memref<1x1xf32, #tpu.memory_space<vmem>>, %arg10: memref<1x1x16xf32, #tpu.memory_space<vmem>>, %arg11: memref<1x32x32xbf16, #tpu.memory_space<vmem>>) attributes {dimension_semantics = [#tpu.dimension_semantics<parallel>], iteration_bounds = array<i64: 2>, scalar_prefetch = 0 : i64, scratch_operands = 1 : i64, tpu.core_type = #tpu.core_type<tc>, window_params = [{transform_indices = @transform_0, window_bounds = array<i64: 1, 32, 32>}, {pipeline_mode = #tpu.pipeline_mode<synchronous>, transform_indices = @transform_1, window_bounds = array<i64: 3, 32, 32>}, {pipeline_mode = #tpu.pipeline_mode<synchronous>, transform_indices = @transform_2, window_bounds = array<i64: 1, 32>}, {pipeline_mode = #tpu.pipeline_mode<synchronous>, transform_indices = @transform_3, window_bounds = array<i64: 1, 32>}, {pipeline_mode = #tpu.pipeline_mode<synchronous>, transform_indices = @transform_4, window_bounds = array<i64: 1, 32>}, {pipeline_mode = #tpu.pipeline_mode<synchronous>, transform_indices = @transform_5, window_bounds = array<i64: 3, 32, 32>}, {pipeline_mode = #tpu.pipeline_mode<synchronous>, transform_indices = @transform_6, window_bounds = array<i64: 1, 32>}, {pipeline_mode = #tpu.pipeline_mode<synchronous>, transform_indices = @transform_7, window_bounds = array<i64: 1, 32>}, {pipeline_mode = #tpu.pipeline_mode<synchronous>, transform_indices = @transform_8, window_bounds = array<i64: 1, 1>}, {transform_indices = @transform_9, window_bounds = array<i64: 1, 1, 16>}]} {
    %c0 = arith.constant 0 : index
    %c7 = arith.constant 7 : index
    %c0_0 = arith.constant 0 : index
    %0 = vector.load %arg1[%c0, %c7, %c0_0] : memref<1x32x32xbf16, #tpu.memory_space<vmem>>, vector<1x16x32xbf16>
    %1 = vector.shape_cast %0 : vector<1x16x32xbf16> to vector<16x32xbf16>
    %c0_1 = arith.constant 0 : index
    %c0_2 = arith.constant 0 : index
    %c0_3 = arith.constant 0 : index
    %2 = vector.load %arg2[%c0_1, %c0_2, %c0_3] : memref<3x32x32xbf16, #tpu.memory_space<vmem>>, vector<1x32x32xbf16>
    %3 = vector.shape_cast %2 : vector<1x32x32xbf16> to vector<32x32xbf16>
    %cst = arith.constant dense<0.000000e+00> : vector<16x32xf32>
    %4 = tpu.matmul %1, %3, %cst {dimension_numbers = #tpu.dot_dimension_numbers<[1], [0], [0], [1], [0, 0, 1, 1], [], []>} : vector<16x32xbf16>, vector<32x32xbf16>, vector<16x32xf32> -> vector<16x32xf32>
    %c0_4 = arith.constant 0 : index
    %c8 = arith.constant 8 : index
    %c0_5 = arith.constant 0 : index
    %5 = vector.load %arg1[%c0_4, %c8, %c0_5] : memref<1x32x32xbf16, #tpu.memory_space<vmem>>, vector<1x16x32xbf16>
    %6 = vector.shape_cast %5 : vector<1x16x32xbf16> to vector<16x32xbf16>
    %c1 = arith.constant 1 : index
    %c0_6 = arith.constant 0 : index
    %c0_7 = arith.constant 0 : index
    %7 = vector.load %arg2[%c1, %c0_6, %c0_7] : memref<3x32x32xbf16, #tpu.memory_space<vmem>>, vector<1x32x32xbf16>
    %8 = vector.shape_cast %7 : vector<1x32x32xbf16> to vector<32x32xbf16>
    %cst_8 = arith.constant dense<0.000000e+00> : vector<16x32xf32>
    %9 = tpu.matmul %6, %8, %cst_8 {dimension_numbers = #tpu.dot_dimension_numbers<[1], [0], [0], [1], [0, 0, 1, 1], [], []>} : vector<16x32xbf16>, vector<32x32xbf16>, vector<16x32xf32> -> vector<16x32xf32>
    %10 = arith.addf %4, %9 : vector<16x32xf32>
    %c0_9 = arith.constant 0 : index
    %c9 = arith.constant 9 : index
    %c0_10 = arith.constant 0 : index
    %11 = vector.load %arg1[%c0_9, %c9, %c0_10] : memref<1x32x32xbf16, #tpu.memory_space<vmem>>, vector<1x16x32xbf16>
    %12 = vector.shape_cast %11 : vector<1x16x32xbf16> to vector<16x32xbf16>
    %c2 = arith.constant 2 : index
    %c0_11 = arith.constant 0 : index
    %c0_12 = arith.constant 0 : index
    %13 = vector.load %arg2[%c2, %c0_11, %c0_12] : memref<3x32x32xbf16, #tpu.memory_space<vmem>>, vector<1x32x32xbf16>
    %14 = vector.shape_cast %13 : vector<1x32x32xbf16> to vector<32x32xbf16>
    %cst_13 = arith.constant dense<0.000000e+00> : vector<16x32xf32>
    %15 = tpu.matmul %12, %14, %cst_13 {dimension_numbers = #tpu.dot_dimension_numbers<[1], [0], [0], [1], [0, 0, 1, 1], [], []>} : vector<16x32xbf16>, vector<32x32xbf16>, vector<16x32xf32> -> vector<16x32xf32>
    %16 = arith.addf %10, %15 : vector<16x32xf32>
    %c0_14 = arith.constant 0 : index
    %c0_15 = arith.constant 0 : index
    %17 = vector.load %arg3[%c0_14, %c0_15] : memref<1x32xf32, #tpu.memory_space<vmem>>, vector<1x32xf32>
    %18 = vector.shape_cast %17 : vector<1x32xf32> to vector<32xf32>
    %19 = vector.shape_cast %18 : vector<32xf32> to vector<1x32xf32>
    %20 = vector.broadcast %19 : vector<1x32xf32> to vector<16x32xf32>
    %21 = arith.addf %16, %20 : vector<16x32xf32>
    %cst_16 = arith.constant 0.000000e+00 : f32
    %22 = vector.broadcast %cst_16 : f32 to vector<16x32xf32>
    %23 = arith.maximumf %21, %22 : vector<16x32xf32>
    %cst_17 = arith.constant dense<0.000000e+00> : vector<16xf32>
    %24 = vector.multi_reduction <add>, %23, %cst_17 [1] : vector<16x32xf32> to vector<16xf32>
    %25 = vector.shape_cast %24 : vector<16xf32> to vector<16x1xf32>
    %cst_18 = arith.constant 3.200000e+01 : f32
    %26 = vector.broadcast %cst_18 : f32 to vector<16x1xf32>
    %27 = arith.divf %25, %26 : vector<16x1xf32>
    %28 = arith.mulf %23, %23 : vector<16x32xf32>
    %cst_19 = arith.constant dense<0.000000e+00> : vector<16xf32>
    %29 = vector.multi_reduction <add>, %28, %cst_19 [1] : vector<16x32xf32> to vector<16xf32>
    %30 = vector.shape_cast %29 : vector<16xf32> to vector<16x1xf32>
    %cst_20 = arith.constant 3.200000e+01 : f32
    %31 = vector.broadcast %cst_20 : f32 to vector<16x1xf32>
    %32 = arith.divf %30, %31 : vector<16x1xf32>
    %33 = arith.mulf %27, %27 : vector<16x1xf32>
    %34 = arith.subf %32, %33 : vector<16x1xf32>
    %cst_21 = arith.constant 0.000000e+00 : f32
    %35 = vector.broadcast %cst_21 : f32 to vector<16x1xf32>
    %36 = arith.maximumf %34, %35 : vector<16x1xf32>
    %37 = vector.broadcast %27 : vector<16x1xf32> to vector<16x32xf32>
    %38 = arith.subf %23, %37 : vector<16x32xf32>
    %cst_22 = arith.constant 9.99999974E-6 : f32
    %39 = vector.broadcast %cst_22 : f32 to vector<16x1xf32>
    %40 = arith.addf %36, %39 : vector<16x1xf32>
    %41 = math.rsqrt %40 : vector<16x1xf32>
    %42 = vector.broadcast %41 : vector<16x1xf32> to vector<16x32xf32>
    %43 = arith.mulf %38, %42 : vector<16x32xf32>
    %c0_23 = arith.constant 0 : index
    %c0_24 = arith.constant 0 : index
    %44 = vector.load %arg4[%c0_23, %c0_24] : memref<1x32xf32, #tpu.memory_space<vmem>>, vector<1x32xf32>
    %45 = vector.shape_cast %44 : vector<1x32xf32> to vector<32xf32>
    %46 = vector.shape_cast %45 : vector<32xf32> to vector<1x32xf32>
    %47 = vector.broadcast %46 : vector<1x32xf32> to vector<16x32xf32>
    %48 = arith.mulf %43, %47 : vector<16x32xf32>
    %c0_25 = arith.constant 0 : index
    %c0_26 = arith.constant 0 : index
    %49 = vector.load %arg5[%c0_25, %c0_26] : memref<1x32xf32, #tpu.memory_space<vmem>>, vector<1x32xf32>
    %50 = vector.shape_cast %49 : vector<1x32xf32> to vector<32xf32>
    %51 = vector.shape_cast %50 : vector<32xf32> to vector<1x32xf32>
    %52 = vector.broadcast %51 : vector<1x32xf32> to vector<16x32xf32>
    %53 = arith.addf %48, %52 : vector<16x32xf32>
    %cst_27 = arith.constant 0.000000e+00 : bf16
    %54 = vector.broadcast %cst_27 : bf16 to vector<1x8x32xbf16>
    %c0_28 = arith.constant 0 : index
    %c0_29 = arith.constant 0 : index
    %c0_30 = arith.constant 0 : index
    %55 = vector.load %arg11[%c0_28, %c0_29, %c0_30] : memref<1x32x32xbf16, #tpu.memory_space<vmem>>, vector<1x8x32xbf16>
    tpu.vector_store %arg11[%c0_28, %c0_29, %c0_30], %54 {strides = array<i32>} : memref<1x32x32xbf16, #tpu.memory_space<vmem>>, vector<1x8x32xbf16>,
    %cst_31 = arith.constant 0.000000e+00 : bf16
    %56 = vector.broadcast %cst_31 : bf16 to vector<1x8x32xbf16>
    %c0_32 = arith.constant 0 : index
    %c24 = arith.constant 24 : index
    %c0_33 = arith.constant 0 : index
    %57 = vector.load %arg11[%c0_32, %c24, %c0_33] : memref<1x32x32xbf16, #tpu.memory_space<vmem>>, vector<1x8x32xbf16>
    tpu.vector_store %arg11[%c0_32, %c24, %c0_33], %56 {strides = array<i32>} : memref<1x32x32xbf16, #tpu.memory_space<vmem>>, vector<1x8x32xbf16>,
    %58 = vector.shape_cast %53 : vector<16x32xf32> to vector<1x16x32xf32>
    %59 = arith.truncf %58 : vector<1x16x32xf32> to vector<1x16x32xbf16>
    %c0_34 = arith.constant 0 : index
    %c8_35 = arith.constant 8 : index
    %c0_36 = arith.constant 0 : index
    %60 = vector.load %arg11[%c0_34, %c8_35, %c0_36] : memref<1x32x32xbf16, #tpu.memory_space<vmem>>, vector<1x16x32xbf16>
    tpu.vector_store %arg11[%c0_34, %c8_35, %c0_36], %59 {strides = array<i32>} : memref<1x32x32xbf16, #tpu.memory_space<vmem>>, vector<1x16x32xbf16>,
    %c0_37 = arith.constant 0 : index
    %c7_38 = arith.constant 7 : index
    %c0_39 = arith.constant 0 : index
    %61 = vector.load %arg11[%c0_37, %c7_38, %c0_39] : memref<1x32x32xbf16, #tpu.memory_space<vmem>>, vector<1x16x32xbf16>
    %62 = vector.shape_cast %61 : vector<1x16x32xbf16> to vector<16x32xbf16>
    %c0_40 = arith.constant 0 : index
    %c0_41 = arith.constant 0 : index
    %c0_42 = arith.constant 0 : index
    %63 = vector.load %arg6[%c0_40, %c0_41, %c0_42] : memref<3x32x32xbf16, #tpu.memory_space<vmem>>, vector<1x32x32xbf16>
    %64 = vector.shape_cast %63 : vector<1x32x32xbf16> to vector<32x32xbf16>
    %cst_43 = arith.constant dense<0.000000e+00> : vector<16x32xf32>
    %65 = tpu.matmul %62, %64, %cst_43 {dimension_numbers = #tpu.dot_dimension_numbers<[1], [0], [0], [1], [0, 0, 1, 1], [], []>} : vector<16x32xbf16>, vector<32x32xbf16>, vector<16x32xf32> -> vector<16x32xf32>
    %c0_44 = arith.constant 0 : index
    %c8_45 = arith.constant 8 : index
    %c0_46 = arith.constant 0 : index
    %66 = vector.load %arg11[%c0_44, %c8_45, %c0_46] : memref<1x32x32xbf16, #tpu.memory_space<vmem>>, vector<1x16x32xbf16>
    %67 = vector.shape_cast %66 : vector<1x16x32xbf16> to vector<16x32xbf16>
    %c1_47 = arith.constant 1 : index
    %c0_48 = arith.constant 0 : index
    %c0_49 = arith.constant 0 : index
    %68 = vector.load %arg6[%c1_47, %c0_48, %c0_49] : memref<3x32x32xbf16, #tpu.memory_space<vmem>>, vector<1x32x32xbf16>
    %69 = vector.shape_cast %68 : vector<1x32x32xbf16> to vector<32x32xbf16>
    %cst_50 = arith.constant dense<0.000000e+00> : vector<16x32xf32>
    %70 = tpu.matmul %67, %69, %cst_50 {dimension_numbers = #tpu.dot_dimension_numbers<[1], [0], [0], [1], [0, 0, 1, 1], [], []>} : vector<16x32xbf16>, vector<32x32xbf16>, vector<16x32xf32> -> vector<16x32xf32>
    %71 = arith.addf %65, %70 : vector<16x32xf32>
    %c0_51 = arith.constant 0 : index
    %c9_52 = arith.constant 9 : index
    %c0_53 = arith.constant 0 : index
    %72 = vector.load %arg11[%c0_51, %c9_52, %c0_53] : memref<1x32x32xbf16, #tpu.memory_space<vmem>>, vector<1x16x32xbf16>
    %73 = vector.shape_cast %72 : vector<1x16x32xbf16> to vector<16x32xbf16>
    %c2_54 = arith.constant 2 : index
    %c0_55 = arith.constant 0 : index
    %c0_56 = arith.constant 0 : index
    %74 = vector.load %arg6[%c2_54, %c0_55, %c0_56] : memref<3x32x32xbf16, #tpu.memory_space<vmem>>, vector<1x32x32xbf16>
    %75 = vector.shape_cast %74 : vector<1x32x32xbf16> to vector<32x32xbf16>
    %cst_57 = arith.constant dense<0.000000e+00> : vector<16x32xf32>
    %76 = tpu.matmul %73, %75, %cst_57 {dimension_numbers = #tpu.dot_dimension_numbers<[1], [0], [0], [1], [0, 0, 1, 1], [], []>} : vector<16x32xbf16>, vector<32x32xbf16>, vector<16x32xf32> -> vector<16x32xf32>
    %77 = arith.addf %71, %76 : vector<16x32xf32>
    %c0_58 = arith.constant 0 : index
    %c0_59 = arith.constant 0 : index
    %78 = vector.load %arg7[%c0_58, %c0_59] : memref<1x32xf32, #tpu.memory_space<vmem>>, vector<1x32xf32>
    %79 = vector.shape_cast %78 : vector<1x32xf32> to vector<32xf32>
    %80 = vector.shape_cast %79 : vector<32xf32> to vector<1x32xf32>
    %81 = vector.broadcast %80 : vector<1x32xf32> to vector<16x32xf32>
    %82 = arith.addf %77, %81 : vector<16x32xf32>
    %cst_60 = arith.constant 0.000000e+00 : f32
    %83 = vector.broadcast %cst_60 : f32 to vector<16x32xf32>
    %84 = arith.maximumf %82, %83 : vector<16x32xf32>
    %cst_61 = arith.constant dense<0.000000e+00> : vector<16xf32>
    %85 = vector.multi_reduction <add>, %84, %cst_61 [1] : vector<16x32xf32> to vector<16xf32>
    %86 = vector.shape_cast %85 : vector<16xf32> to vector<16x1xf32>
    %cst_62 = arith.constant 3.200000e+01 : f32
    %87 = vector.broadcast %cst_62 : f32 to vector<16x1xf32>
    %88 = arith.divf %86, %87 : vector<16x1xf32>
    %89 = arith.mulf %84, %84 : vector<16x32xf32>
    %cst_63 = arith.constant dense<0.000000e+00> : vector<16xf32>
    %90 = vector.multi_reduction <add>, %89, %cst_63 [1] : vector<16x32xf32> to vector<16xf32>
    %91 = vector.shape_cast %90 : vector<16xf32> to vector<16x1xf32>
    %cst_64 = arith.constant 3.200000e+01 : f32
    %92 = vector.broadcast %cst_64 : f32 to vector<16x1xf32>
    %93 = arith.divf %91, %92 : vector<16x1xf32>
    %94 = arith.mulf %88, %88 : vector<16x1xf32>
    %95 = arith.subf %93, %94 : vector<16x1xf32>
    %cst_65 = arith.constant 0.000000e+00 : f32
    %96 = vector.broadcast %cst_65 : f32 to vector<16x1xf32>
    %97 = arith.maximumf %95, %96 : vector<16x1xf32>
    %98 = vector.broadcast %88 : vector<16x1xf32> to vector<16x32xf32>
    %99 = arith.subf %84, %98 : vector<16x32xf32>
    %cst_66 = arith.constant 9.99999974E-6 : f32
    %100 = vector.broadcast %cst_66 : f32 to vector<16x1xf32>
    %101 = arith.addf %97, %100 : vector<16x1xf32>
    %102 = math.rsqrt %101 : vector<16x1xf32>
    %103 = vector.broadcast %102 : vector<16x1xf32> to vector<16x32xf32>
    %104 = arith.mulf %99, %103 : vector<16x32xf32>
    %105 = vector.shape_cast %104 : vector<16x32xf32> to vector<1x16x32xf32>
    %c0_67 = arith.constant 0 : index
    %c0_68 = arith.constant 0 : index
    %106 = vector.load %arg8[%c0_67, %c0_68] : memref<1x32xf32, #tpu.memory_space<vmem>>, vector<1x32xf32>
    %107 = vector.shape_cast %106 : vector<1x32xf32> to vector<32xf32>
    %108 = vector.shape_cast %107 : vector<32xf32> to vector<1x1x32xf32>
    %109 = vector.broadcast %108 : vector<1x1x32xf32> to vector<1x16x32xf32>
    %110 = arith.mulf %105, %109 : vector<1x16x32xf32>
    %cst_69 = arith.constant dense<0.000000e+00> : vector<1x16xf32>
    %111 = vector.multi_reduction <add>, %110, %cst_69 [2] : vector<1x16x32xf32> to vector<1x16xf32>
    %c0_70 = arith.constant 0 : index
    %c0_71 = arith.constant 0 : index
    %112 = vector.load %arg9[%c0_70, %c0_71] : memref<1x1xf32, #tpu.memory_space<vmem>>, vector<1x1xf32>
    %113 = vector.extract %112[0, 0] : f32 from vector<1x1xf32>
    %114 = vector.broadcast %113 : f32 to vector<1x16xf32>
    %115 = arith.addf %111, %114 : vector<1x16xf32>
    %116 = vector.shape_cast %115 : vector<1x16xf32> to vector<1x1x16xf32>
    %c0_72 = arith.constant 0 : index
    %c0_73 = arith.constant 0 : index
    %c0_74 = arith.constant 0 : index
    %117 = vector.load %arg10[%c0_72, %c0_73, %c0_74] : memref<1x1x16xf32, #tpu.memory_space<vmem>>, vector<1x1x16xf32>
    tpu.vector_store %arg10[%c0_72, %c0_73, %c0_74], %116 {strides = array<i32>} : memref<1x1x16xf32, #tpu.memory_space<vmem>>, vector<1x1x16xf32>,
    return
  }
  func.func @transform_0(%arg0: i32) -> (i32, i32, i32) {
    %c0_i32 = arith.constant 0 : i32
    %c0_i32_0 = arith.constant 0 : i32
    %c0_i32_1 = arith.constant 0 : i32
    return %arg0, %c0_i32, %c0_i32_0 : i32, i32, i32
  }
  func.func @transform_1(%arg0: i32) -> (i32, i32, i32) {
    %c0_i32 = arith.constant 0 : i32
    %c0_i32_0 = arith.constant 0 : i32
    %c0_i32_1 = arith.constant 0 : i32
    %c0_i32_2 = arith.constant 0 : i32
    return %c0_i32, %c0_i32_0, %c0_i32_1 : i32, i32, i32
  }
  func.func @transform_2(%arg0: i32) -> (i32, i32) {
    %c0_i32 = arith.constant 0 : i32
    %c0_i32_0 = arith.constant 0 : i32
    %c0_i32_1 = arith.constant 0 : i32
    return %c0_i32, %c0_i32_0 : i32, i32
  }
  func.func @transform_3(%arg0: i32) -> (i32, i32) {
    %c0_i32 = arith.constant 0 : i32
    %c0_i32_0 = arith.constant 0 : i32
    %c0_i32_1 = arith.constant 0 : i32
    return %c0_i32, %c0_i32_0 : i32, i32
  }
  func.func @transform_4(%arg0: i32) -> (i32, i32) {
    %c0_i32 = arith.constant 0 : i32
    %c0_i32_0 = arith.constant 0 : i32
    %c0_i32_1 = arith.constant 0 : i32
    return %c0_i32, %c0_i32_0 : i32, i32
  }
  func.func @transform_5(%arg0: i32) -> (i32, i32, i32) {
    %c0_i32 = arith.constant 0 : i32
    %c0_i32_0 = arith.constant 0 : i32
    %c0_i32_1 = arith.constant 0 : i32
    %c0_i32_2 = arith.constant 0 : i32
    return %c0_i32, %c0_i32_0, %c0_i32_1 : i32, i32, i32
  }
  func.func @transform_6(%arg0: i32) -> (i32, i32) {
    %c0_i32 = arith.constant 0 : i32
    %c0_i32_0 = arith.constant 0 : i32
    %c0_i32_1 = arith.constant 0 : i32
    return %c0_i32, %c0_i32_0 : i32, i32
  }
  func.func @transform_7(%arg0: i32) -> (i32, i32) {
    %c0_i32 = arith.constant 0 : i32
    %c0_i32_0 = arith.constant 0 : i32
    %c0_i32_1 = arith.constant 0 : i32
    return %c0_i32, %c0_i32_0 : i32, i32
  }
  func.func @transform_8(%arg0: i32) -> (i32, i32) {
    %c0_i32 = arith.constant 0 : i32
    %c0_i32_0 = arith.constant 0 : i32
    %c0_i32_1 = arith.constant 0 : i32
    return %c0_i32, %c0_i32_0 : i32, i32
  }
  func.func @transform_9(%arg0: i32) -> (i32, i32, i32) {
    %c0_i32 = arith.constant 0 : i32
    %c0_i32_0 = arith.constant 0 : i32
    %c0_i32_1 = arith.constant 0 : i32
    return %arg0, %c0_i32, %c0_i32_0 : i32, i32, i32
  }
}

</mosaic_0001>

<llo_original>
// kernel: predictor_forward.1
$region0: #{predictor_forward.1}
  #allocation0 [shape = 'u32[]', space=smem, size = 0x4, offset = 0x4, fixed_abs, tag = 'smem constant byte address 0x4 - core index']
  #allocation1 [shape = 'u32[144,128]{1,0:T(1,128)}', space=vmem, size = 0x12000, scoped, tag = 'internal scratch']
  #allocation2 [shape = 'bf16[1,32,32]{2,1,0:T(16,128)(2,1)}', space=vmem, size = 0x2000, scoped, tag = 'scratch operand']
  #allocation3 [shape = 'f32[1,1]{1,0:T(1,128)S(1)}', space=vmem, size = 0x200, scoped, tag = 'scoped memory for predictor_forward.1']
  %s0 = inlined_call_operand.vmem [shape: bf16[2,32,32], index: 0, kind: input, shape index: {}]
  %s1 = inlined_call_operand.vmem [shape: bf16[3,32,32], index: 1, kind: input, shape index: {}]
  %s2 = inlined_call_operand.vmem [shape: f32[1,32], index: 2, kind: input, shape index: {}]
  %s3 = inlined_call_operand.vmem [shape: f32[1,32], index: 3, kind: input, shape index: {}]
  %s4 = inlined_call_operand.vmem [shape: f32[1,32], index: 4, kind: input, shape index: {}]
  %s5 = inlined_call_operand.vmem [shape: bf16[3,32,32], index: 5, kind: input, shape index: {}]
  %s6 = inlined_call_operand.vmem [shape: f32[1,32], index: 6, kind: input, shape index: {}]
  %s7 = inlined_call_operand.vmem [shape: f32[1,32], index: 7, kind: input, shape index: {}]
  %s8 = inlined_call_operand.<no memory space> [shape: f32[1,1], index: 8, kind: input, shape index: {}]
  %s9 = inlined_call_operand.hbm [shape: f32[2,1,16], index: 9, kind: output, shape index: {}]
  %s10 = sld [smem:[#allocation0]]
  $region69: #{predictor_forward.1} parent=0
    _
  %s12 = ssub.s32 1, %s10
  %s13 = scalar_select 0, %s12, %s10
  %v14 = vstv %s8
  %15 = vst [vmem:[#allocation3] sm:$0x1] %v14
  $region1: #{predictor_forward.1} parent=0
    #allocation4 [shape = 'u8[1024]{0}', space=vmem, size = 0x400, scoped, tag = 'output window, operand 0']
    #allocation5 [shape = 's32[2]{0}', space=sflag, size = 0x8, scoped, tag = 'scoped memory for predictor_forward.1']
    %16 = vsyncpa [#allocation5], 0
    %s17 = scalar_lea.sflag [#allocation5], 1
    %18 = vsyncpa %s17, 0
    loop: start=0, step=1, limit=4
    $region2: #{predictor_forward.1} parent=1 // loop_pre_header
      _
    $region3: #{predictor_forward.1} parent=1 // loop_header
      %s20 = sphi 0, %s24
      %p21 = scmp.ge.s32.totalorder %s20, 4
      %s30 = sphi 0, %s32
      %s33 = sphi 0, %s30
      %s34 = sphi 0, %s33
      %s50 = sphi 0, %s34
      %s54 = sphi 0, %s54
      %s56 = sphi 0, %s54
      %s57 = sphi 0, %s56
      %s71 = sphi 0, %s57
      %s75 = sphi 0, %s75
      %s77 = sphi 0, %s75
      %s78 = sphi 0, %s77
      %s92 = sphi 0, %s78
      %s96 = sphi 0, %s96
      %s98 = sphi 0, %s96
      %s99 = sphi 0, %s98
      %s113 = sphi 0, %s99
      %s117 = sphi 0, %s117
      %s119 = sphi 0, %s117
      %s120 = sphi 0, %s119
      %s134 = sphi 0, %s120
      %s138 = sphi 0, %s138
      %s140 = sphi 0, %s138
      %s141 = sphi 0, %s140
      %s155 = sphi 0, %s141
      %s159 = sphi 0, %s159
      %s161 = sphi 0, %s159
      %s162 = sphi 0, %s161
      %s176 = sphi 0, %s162
      %s180 = sphi 0, %s180
      %s182 = sphi 0, %s180
      %s183 = sphi 0, %s182
      %s197 = sphi 0, %s183
      %s201 = sphi 0, %s201
      %s203 = sphi 0, %s201
      %s204 = sphi 0, %s203
      %s218 = sphi 0, %s204
      %s224 = sphi 0, %s226
      %s227 = sphi 0, %s224
      %s228 = sphi 0, %s227
      %s244 = sphi 0, %s228
    $region4: #{predictor_forward.1} parent=1 // loop_header_branch
      %23 = sbr.rel (%p21) target = $region8
    $region5: #{predictor_forward.1} parent=1 // loop_body
      %s25 = ssub.s32 %s20, 1
      %s26 = ssub.s32 %s20, 2
      %s27 = sadd.s32 %s20, 1
      %s28 = ssub.s32 %s20, %s27
      %p29 = scmp.eq.s32.totalorder %s28, 0
      %s31 = sadd.s32 %s30, 1
      %s32 = scalar_select %p29, %s30, %s31
      %p35 = pneg %p29
      %p36 = scmp.eq.s32.totalorder %s20, 1
      %p37 = por %p35, %p36
      %p38 = scmp.ne.s32.totalorder %s30, %s33
      %p39 = scmp.eq.s32.totalorder %s20, 0
      %p40 = por %p38, %p39
      %p41 = scmp.ne.s32.totalorder %s30, %s33
      %p42 = scmp.eq.s32.totalorder %s25, 1
      %p43 = por %p41, %p42
      %p44 = scmp.ne.s32.totalorder %s33, %s34
      %p45 = scmp.eq.s32.totalorder %s25, 0
      %p46 = por %p44, %p45
      %p47 = scmp.ne.s32.totalorder %s33, %s34
      %p48 = scmp.eq.s32.totalorder %s26, 1
      %p49 = por %p47, %p48
      %p51 = scmp.ne.s32.totalorder %s34, %s50
      %p52 = scmp.eq.s32.totalorder %s26, 0
      %p53 = por %p51, %p52
      %s55 = sadd.s32 %s54, 1
      %p58 = scmp.eq.s32.totalorder %s20, 1
      %p59 = scmp.ne.s32.totalorder %s54, %s56
      %p60 = scmp.eq.s32.totalorder %s20, 0
      %p61 = por %p59, %p60
      %p62 = scmp.ne.s32.totalorder %s54, %s56
      %p63 = scmp.eq.s32.totalorder %s25, 1
      %p64 = por %p62, %p63
      %p65 = scmp.ne.s32.totalorder %s56, %s57
      %p66 = scmp.eq.s32.totalorder %s25, 0
      %p67 = por %p65, %p66
      %p68 = scmp.ne.s32.totalorder %s56, %s57
      %p69 = scmp.eq.s32.totalorder %s26, 1
      %p70 = por %p68, %p69
      %p72 = scmp.ne.s32.totalorder %s57, %s71
      %p73 = scmp.eq.s32.totalorder %s26, 0
      %p74 = por %p72, %p73
      %s76 = sadd.s32 %s75, 1
      %p79 = scmp.eq.s32.totalorder %s20, 1
      %p80 = scmp.ne.s32.totalorder %s75, %s77
      %p81 = scmp.eq.s32.totalorder %s20, 0
      %p82 = por %p80, %p81
      %p83 = scmp.ne.s32.totalorder %s75, %s77
      %p84 = scmp.eq.s32.totalorder %s25, 1
      %p85 = por %p83, %p84
      %p86 = scmp.ne.s32.totalorder %s77, %s78
      %p87 = scmp.eq.s32.totalorder %s25, 0
      %p88 = por %p86, %p87
      %p89 = scmp.ne.s32.totalorder %s77, %s78
      %p90 = scmp.eq.s32.totalorder %s26, 1
      %p91 = por %p89, %p90
      %p93 = scmp.ne.s32.totalorder %s78, %s92
      %p94 = scmp.eq.s32.totalorder %s26, 0
      %p95 = por %p93, %p94
      %s97 = sadd.s32 %s96, 1
      %p100 = scmp.eq.s32.totalorder %s20, 1
      %p101 = scmp.ne.s32.totalorder %s96, %s98
      %p102 = scmp.eq.s32.totalorder %s20, 0
      %p103 = por %p101, %p102
      %p104 = scmp.ne.s32.totalorder %s96, %s98
      %p105 = scmp.eq.s32.totalorder %s25, 1
      %p106 = por %p104, %p105
      %p107 = scmp.ne.s32.totalorder %s98, %s99
      %p108 = scmp.eq.s32.totalorder %s25, 0
      %p109 = por %p107, %p108
      %p110 = scmp.ne.s32.totalorder %s98, %s99
      %p111 = scmp.eq.s32.totalorder %s26, 1
      %p112 = por %p110, %p111
      %p114 = scmp.ne.s32.totalorder %s99, %s113
      %p115 = scmp.eq.s32.totalorder %s26, 0
      %p116 = por %p114, %p115
      %s118 = sadd.s32 %s117, 1
      %p121 = scmp.eq.s32.totalorder %s20, 1
      %p122 = scmp.ne.s32.totalorder %s117, %s119
      %p123 = scmp.eq.s32.totalorder %s20, 0
      %p124 = por %p122, %p123
      %p125 = scmp.ne.s32.totalorder %s117, %s119
      %p126 = scmp.eq.s32.totalorder %s25, 1
      %p127 = por %p125, %p126
      %p128 = scmp.ne.s32.totalorder %s119, %s120
      %p129 = scmp.eq.s32.totalorder %s25, 0
      %p130 = por %p128, %p129
      %p131 = scmp.ne.s32.totalorder %s119, %s120
      %p132 = scmp.eq.s32.totalorder %s26, 1
      %p133 = por %p131, %p132
      %p135 = scmp.ne.s32.totalorder %s120, %s134
      %p136 = scmp.eq.s32.totalorder %s26, 0
      %p137 = por %p135, %p136
      %s139 = sadd.s32 %s138, 1
      %p142 = scmp.eq.s32.totalorder %s20, 1
      %p143 = scmp.ne.s32.totalorder %s138, %s140
      %p144 = scmp.eq.s32.totalorder %s20, 0
      %p145 = por %p143, %p144
      %p146 = scmp.ne.s32.totalorder %s138, %s140
      %p147 = scmp.eq.s32.totalorder %s25, 1
      %p148 = por %p146, %p147
      %p149 = scmp.ne.s32.totalorder %s140, %s141
      %p150 = scmp.eq.s32.totalorder %s25, 0
      %p151 = por %p149, %p150
      %p152 = scmp.ne.s32.totalorder %s140, %s141
      %p153 = scmp.eq.s32.totalorder %s26, 1
      %p154 = por %p152, %p153
      %p156 = scmp.ne.s32.totalorder %s141, %s155
      %p157 = scmp.eq.s32.totalorder %s26, 0
      %p158 = por %p156, %p157
      %s160 = sadd.s32 %s159, 1
      %p163 = scmp.eq.s32.totalorder %s20, 1
      %p164 = scmp.ne.s32.totalorder %s159, %s161
      %p165 = scmp.eq.s32.totalorder %s20, 0
      %p166 = por %p164, %p165
      %p167 = scmp.ne.s32.totalorder %s159, %s161
      %p168 = scmp.eq.s32.totalorder %s25, 1
      %p169 = por %p167, %p168
      %p170 = scmp.ne.s32.totalorder %s161, %s162
      %p171 = scmp.eq.s32.totalorder %s25, 0
      %p172 = por %p170, %p171
      %p173 = scmp.ne.s32.totalorder %s161, %s162
      %p174 = scmp.eq.s32.totalorder %s26, 1
      %p175 = por %p173, %p174
      %p177 = scmp.ne.s32.totalorder %s162, %s176
      %p178 = scmp.eq.s32.totalorder %s26, 0
      %p179 = por %p177, %p178
      %s181 = sadd.s32 %s180, 1
      %p184 = scmp.eq.s32.totalorder %s20, 1
      %p185 = scmp.ne.s32.totalorder %s180, %s182
      %p186 = scmp.eq.s32.totalorder %s20, 0
      %p187 = por %p185, %p186
      %p188 = scmp.ne.s32.totalorder %s180, %s182
      %p189 = scmp.eq.s32.totalorder %s25, 1
      %p190 = por %p188, %p189
      %p191 = scmp.ne.s32.totalorder %s182, %s183
      %p192 = scmp.eq.s32.totalorder %s25, 0
      %p193 = por %p191, %p192
      %p194 = scmp.ne.s32.totalorder %s182, %s183
      %p195 = scmp.eq.s32.totalorder %s26, 1
      %p196 = por %p194, %p195
      %p198 = scmp.ne.s32.totalorder %s183, %s197
      %p199 = scmp.eq.s32.totalorder %s26, 0
      %p200 = por %p198, %p199
      %s202 = sadd.s32 %s201, 1
      %p205 = scmp.eq.s32.totalorder %s20, 1
      %p206 = scmp.ne.s32.totalorder %s201, %s203
      %p207 = scmp.eq.s32.totalorder %s20, 0
      %p208 = por %p206, %p207
      %p209 = scmp.ne.s32.totalorder %s201, %s203
      %p210 = scmp.eq.s32.totalorder %s25, 1
      %p211 = por %p209, %p210
      %p212 = scmp.ne.s32.totalorder %s203, %s204
      %p213 = scmp.eq.s32.totalorder %s25, 0
      %p214 = por %p212, %p213
      %p215 = scmp.ne.s32.totalorder %s203, %s204
      %p216 = scmp.eq.s32.totalorder %s26, 1
      %p217 = por %p215, %p216
      %p219 = scmp.ne.s32.totalorder %s204, %s218
      %p220 = scmp.eq.s32.totalorder %s26, 0
      %p221 = por %p219, %p220
      %s222 = ssub.s32 %s20, %s27
      %p223 = scmp.eq.s32.totalorder %s222, 0
      %s225 = sadd.s32 %s224, 1
      %s226 = scalar_select %p223, %s224, %s225
      %p229 = pneg %p223
      %p230 = scmp.eq.s32.totalorder %s20, 1
      %p231 = por %p229, %p230
      %p232 = scmp.ne.s32.totalorder %s224, %s227
      %p233 = scmp.eq.s32.totalorder %s20, 0
      %p234 = por %p232, %p233
      %p235 = scmp.ne.s32.totalorder %s224, %s227
      %p236 = scmp.eq.s32.totalorder %s25, 1
      %p237 = por %p235, %p236
      %p238 = scmp.ne.s32.totalorder %s227, %s228
      %p239 = scmp.eq.s32.totalorder %s25, 0
      %p240 = por %p238, %p239
      %p241 = scmp.ne.s32.totalorder %s227, %s228
      %p242 = scmp.eq.s32.totalorder %s26, 1
      %p243 = por %p241, %p242
      %p245 = scmp.ne.s32.totalorder %s228, %s244
      %p246 = scmp.eq.s32.totalorder %s26, 0
      %p247 = por %p245, %p246
      %p248 = scmp.le.s32.totalorder 1, %s20
      %p249 = scmp.lt.s32.totalorder %s20, 3
      %p250 = pnand %p248, %p249
      %p251 = pneg %p250
      // Predicated region
      $region9: #{predictor_forward.1} parent=5 // pred_check
        _
      $region10: #{predictor_forward.1} parent=5 // pred_check_branch
        %253 = sbr.rel (%p250) target = $region12
      $region11: #{predictor_forward.1} parent=5 // pred_region
        %s254 = ssub.s32 %s20, 1
        // Predicated region
        $region13: #{predictor_forward.1} parent=11 // pred_check
          %p255 = pneg %p67
        $region14: #{predictor_forward.1} parent=11 // pred_check_branch
          %257 = sbr.rel (%p255) target = $region16
        $region15: #{predictor_forward.1} parent=11 // pred_region
          _
        $region16: #{predictor_forward.1} parent=11 // pred_fallthru
          _
        // Predicated region
        $region17: #{predictor_forward.1} parent=11 // pred_check
          %p258 = pneg %p88
        $region18: #{predictor_forward.1} parent=11 // pred_check_branch
          %260 = sbr.rel (%p258) target = $region20
        $region19: #{predictor_forward.1} parent=11 // pred_region
          _
        $region20: #{predictor_forward.1} parent=11 // pred_fallthru
          _
        // Predicated region
        $region21: #{predictor_forward.1} parent=11 // pred_check
          %p261 = pneg %p109
        $region22: #{predictor_forward.1} parent=11 // pred_check_branch
          %263 = sbr.rel (%p261) target = $region24
        $region23: #{predictor_forward.1} parent=11 // pred_region
          _
        $region24: #{predictor_forward.1} parent=11 // pred_fallthru
          _
        // Predicated region
        $region25: #{predictor_forward.1} parent=11 // pred_check
          %p264 = pneg %p130
        $region26: #{predictor_forward.1} parent=11 // pred_check_branch
          %266 = sbr.rel (%p264) target = $region28
        $region27: #{predictor_forward.1} parent=11 // pred_region
          _
        $region28: #{predictor_forward.1} parent=11 // pred_fallthru
          _
        // Predicated region
        $region29: #{predictor_forward.1} parent=11 // pred_check
          %p267 = pneg %p151
        $region30: #{predictor_forward.1} parent=11 // pred_check_branch
          %269 = sbr.rel (%p267) target = $region32
        $region31: #{predictor_forward.1} parent=11 // pred_region
          _
        $region32: #{predictor_forward.1} parent=11 // pred_fallthru
          _
        // Predicated region
        $region33: #{predictor_forward.1} parent=11 // pred_check
          %p270 = pneg %p172
        $region34: #{predictor_forward.1} parent=11 // pred_check_branch
          %272 = sbr.rel (%p270) target = $region36
        $region35: #{predictor_forward.1} parent=11 // pred_region
          _
        $region36: #{predictor_forward.1} parent=11 // pred_fallthru
          _
        // Predicated region
        $region37: #{predictor_forward.1} parent=11 // pred_check
          %p273 = pneg %p193
        $region38: #{predictor_forward.1} parent=11 // pred_check_branch
          %275 = sbr.rel (%p273) target = $region40
        $region39: #{predictor_forward.1} parent=11 // pred_region
          _
        $region40: #{predictor_forward.1} parent=11 // pred_fallthru
          _
        // Predicated region
        $region41: #{predictor_forward.1} parent=11 // pred_check
          %p276 = pneg %p214
        $region42: #{predictor_forward.1} parent=11 // pred_check_branch
          %278 = sbr.rel (%p276) target = $region44
        $region43: #{predictor_forward.1} parent=11 // pred_region
          _
        $region44: #{predictor_forward.1} parent=11 // pred_fallthru
          _
      $region12: #{predictor_forward.1} parent=5 // pred_fallthru
        _
      %p279 = scmp.lt.s32.totalorder %s20, 2
      // Predicated region
      $region45: #{predictor_forward.1} parent=5 // pred_check
        %p280 = pneg %p279
      $region46: #{predictor_forward.1} parent=5 // pred_check_branch
        %282 = sbr.rel (%p280) target = $region48
      $region47: #{predictor_forward.1} parent=5 // pred_region
        // Predicated region
        $region49: #{predictor_forward.1} parent=47 // pred_check
          %p283 = pneg %p40
        $region50: #{predictor_forward.1} parent=47 // pred_check_branch
          %285 = sbr.rel (%p283) target = $region52
        $region51: #{predictor_forward.1} parent=47 // pred_region
          %p286 = scmp.lt.s32.totalorder %s20, 1
          %s287 = scalar_select %p286, %s20, 1
          %s288 = smul.addr %s287, 4
          %s289 = smul.addr %s288, 4
          %s290 = scalar_lea.vmem %s0, %s289
        $region52: #{predictor_forward.1} parent=47 // pred_fallthru
          _
      $region48: #{predictor_forward.1} parent=5 // pred_fallthru
        _
      %p291 = scmp.le.s32.totalorder 1, %s20
      %p292 = scmp.lt.s32.totalorder %s20, 3
      %p293 = pnand %p291, %p292
      %p294 = pneg %p293
      // Predicated region
      $region53: #{predictor_forward.1} parent=5 // pred_check
        _
      $region54: #{predictor_forward.1} parent=5 // pred_check_branch
        %296 = sbr.rel (%p293) target = $region56
      $region55: #{predictor_forward.1} parent=5 // pred_region
        %s297 = ssub.s32 %s20, 1
        %p298 = scmp.lt.s32.totalorder %s25, 1
        %s299 = scalar_select %p298, %s25, 1
        %s300 = smul.addr %s299, 4
        %s301 = smul.addr %s300, 4
        %s302 = scalar_lea.vmem %s0, %s301
        %p303 = pneg %p46
        %p304 = pneg %p43
        %p305 = pneg %p67
        %p306 = pneg %p64
        %p307 = pneg %p88
        %p308 = pneg %p85
        %p309 = pneg %p109
        %p310 = pneg %p106
        %p311 = pneg %p130
        %p312 = pneg %p127
        %p313 = pneg %p151
        %p314 = pneg %p148
        %p315 = pneg %p172
        %p316 = pneg %p169
        %p317 = pneg %p193
        %p318 = pneg %p190
        %p319 = pneg %p214
        %p320 = pneg %p211
        %p321 = pneg %p240
        %p322 = pneg %p237
        %s323 = sand.u32 %s227, 1
        %s324 = scalar_lea.sflag [#allocation5], %s323
        %s325 = sand.u32 %s227, 1
        %s326 = scalar_lea.vmem [#allocation4], %s325
        %p327 = scmp.lt.s32.totalorder %s25, 1
        %s328 = scalar_select %p327, %s25, 1
        %s329 = smul.addr %s328, 4
        %s330 = smul.addr %s329, 4
        %s331 = scalar_lea.vmem %s0, %s330
        %v333 = vld [vmem:[%s331] sm:$0x8]
        %v334 = vld [vmem:[%s331 + $0x4] sm:$0xf]
        %v335 = vld [vmem:[%s331 + $0x8] sm:$0xf]
        %v336 = vld [vmem:[%s1] sm:$0xf]
        %v337 = vld [vmem:[%s1 + $0x4] sm:$0xf]
        %v338 = vld [vmem:[%s1 + $0x8] sm:$0xf]
        %v339 = vld [vmem:[%s1 + $0xc] sm:$0xf]
        %s340 = scalar_lea.vmem %s1, 16
        %v341 = vld [vmem:[%s340] sm:$0xf]
        %v342 = vld [vmem:[%s340 + $0x4] sm:$0xf]
        %v343 = vld [vmem:[%s340 + $0x8] sm:$0xf]
        %v344 = vld [vmem:[%s340 + $0xc] sm:$0xf]
        %v347 = vunpack.c.l.b16 %v334
        %v348 = vunpack.c.l.b16 %v335
        %v349 = vpack.c.b16 %v348, %v347
        %v354 = vunpack.c.l.b16 %v341
        %v355 = vunpack.c.l.b16 %v342
        %v356 = vunpack.c.l.b16 %v343
        %v357 = vunpack.c.l.b16 %v344
        %v358 = vpack.c.b16 %v355, %v354
        %v359 = vpack.c.b16 %v357, %v356
        %vm362 = vcmask 261120
        %v364 = vsel %vm362, %v349, 0
        %366 = vmatprep.subr.bf16.mxu0 0
        %367 = vmatpush1.bf16.msra.mxu0 %v358
        %368 = vmatprep.subr.bf16.mxu0 0
        %369 = vmatpush1.bf16.msra.mxu0 %v359
        %370 = vmatprep.subr.bf16.mxu0 0
        %371 = vmatpush1.bf16.msra.mxu0 0
        %372 = vmatprep.subr.bf16.mxu0 0
        %373 = vmatpush1.bf16.msra.mxu0 0
        %374 = vmatprep.subr.bf16.mxu0 0
        %375 = vmatpush1.bf16.msra.mxu0 0
        %376 = vmatprep.subr.bf16.mxu0 0
        %377 = vmatpush1.bf16.msra.mxu0 0
        %378 = vmatprep.subr.bf16.mxu0 0
        %379 = vmatpush1.bf16.msra.mxu0 0
        %380 = vmatprep.subr.bf16.mxu0 0
        %381 = vmatpush1.bf16.msra.mxu0 0
        %382 = vmatprep.subr.bf16.mxu0 0
        %383 = vmatpush1.bf16.msra.mxu0 0
        %384 = vmatprep.subr.bf16.mxu0 0
        %385 = vmatpush1.bf16.msra.mxu0 0
        %386 = vmatprep.subr.bf16.mxu0 0
        %387 = vmatpush1.bf16.msra.mxu0 0
        %388 = vmatprep.subr.bf16.mxu0 0
        %389 = vmatpush1.bf16.msra.mxu0 0
        %390 = vmatprep.subr.bf16.mxu0 0
        %391 = vmatpush1.bf16.msra.mxu0 0
        %392 = vmatprep.subr.bf16.mxu0 0
        %393 = vmatpush1.bf16.msra.mxu0 0
        %394 = vmatprep.subr.bf16.mxu0 0
        %395 = vmatpush1.bf16.msra.mxu0 0
        %396 = vmatprep.subr.bf16.mxu0 0
        %397 = vmatpush1.bf16.msra.mxu0 0
        %398 = vmatprep.mubr.bf16.mxu0 0
        %399 = vmatmul.mubr.bf16.gmra.mrb[0].mxu0 %v364
        %v400 = vpop.f32.mrb[0].mxu0
        %v401 = vadd.f32 0.0, %v400
        %v402 = vpop.f32.mrb[0].mxu0
        %v403 = vpop.f32.mrb[0].mxu0
        %v404 = vadd.f32 0.0, %v403
        %v405 = vpop.f32.mrb[0].mxu0
        %406 = vdwg.mxu0
        %v408 = vunpack.c.l.b16 %v333
        %v409 = vpack.c.b16 %v347, %v408
        %v410 = vpack.c.b16 %v348, %v348
        %vm411 = vsmask.f32 4352
        %v413 = vshrl.u32 %v409, 16
        %v415 = vrot.slane %v413, 3
        %v416 = vshll.u32 %v409, 16
        %v418 = vrot.slane %v416, 4
        %v419 = vor.u32 %v415, %v418
        %v421 = vshrl.u32 %v410, 16
        %v423 = vrot.slane %v421, 3
        %v424 = vshll.u32 %v410, 16
        %v426 = vrot.slane %v424, 4
        %v427 = vor.u32 %v423, %v426
        %v428 = vsel %vm411, %v419, %v427
        %v433 = vunpack.c.l.b16 %v336
        %v434 = vunpack.c.l.b16 %v337
        %v435 = vunpack.c.l.b16 %v338
        %v436 = vunpack.c.l.b16 %v339
        %v437 = vpack.c.b16 %v434, %v433
        %v438 = vpack.c.b16 %v436, %v435
        %v442 = vsel %vm362, %v428, 0
        %444 = vmatprep.subr.bf16.mxu0 0
        %445 = vmatpush1.bf16.msra.mxu0 %v437
        %446 = vmatprep.subr.bf16.mxu0 0
        %447 = vmatpush1.bf16.msra.mxu0 %v438
        %448 = vmatprep.subr.bf16.mxu0 0
        %449 = vmatpush1.bf16.msra.mxu0 0
        %450 = vmatprep.subr.bf16.mxu0 0
        %451 = vmatpush1.bf16.msra.mxu0 0
        %452 = vmatprep.subr.bf16.mxu0 0
        %453 = vmatpush1.bf16.msra.mxu0 0
        %454 = vmatprep.subr.bf16.mxu0 0
        %455 = vmatpush1.bf16.msra.mxu0 0
        %456 = vmatprep.subr.bf16.mxu0 0
        %457 = vmatpush1.bf16.msra.mxu0 0
        %458 = vmatprep.subr.bf16.mxu0 0
        %459 = vmatpush1.bf16.msra.mxu0 0
        %460 = vmatprep.subr.bf16.mxu0 0
        %461 = vmatpush1.bf16.msra.mxu0 0
        %462 = vmatprep.subr.bf16.mxu0 0
        %463 = vmatpush1.bf16.msra.mxu0 0
        %464 = vmatprep.subr.bf16.mxu0 0
        %465 = vmatpush1.bf16.msra.mxu0 0
        %466 = vmatprep.subr.bf16.mxu0 0
        %467 = vmatpush1.bf16.msra.mxu0 0
        %468 = vmatprep.subr.bf16.mxu0 0
        %469 = vmatpush1.bf16.msra.mxu0 0
        %470 = vmatprep.subr.bf16.mxu0 0
        %471 = vmatpush1.bf16.msra.mxu0 0
        %472 = vmatprep.subr.bf16.mxu0 0
        %473 = vmatpush1.bf16.msra.mxu0 0
        %474 = vmatprep.subr.bf16.mxu0 0
        %475 = vmatpush1.bf16.msra.mxu0 0
        %476 = vmatprep.mubr.bf16.mxu0 0
        %477 = vmatmul.mubr.bf16.gmra.mrb[0].mxu0 %v442
        %v478 = vpop.f32.mrb[0].mxu0
        %v479 = vadd.f32 %v401, %v478
        %v480 = vpop.f32.mrb[0].mxu0
        %v481 = vpop.f32.mrb[0].mxu0
        %v482 = vadd.f32 %v404, %v481
        %v483 = vpop.f32.mrb[0].mxu0
        %484 = vdwg.mxu0
        %v485 = vld [vmem:[%s331 + $0x4] sm:$0xf]
        %v486 = vld [vmem:[%s331 + $0x8] sm:$0xf]
        %v487 = vld [vmem:[%s331 + $0xc] sm:$0x1]
        %s488 = scalar_lea.vmem %s1, 32
        %v489 = vld [vmem:[%s488] sm:$0xf]
        %v490 = vld [vmem:[%s488 + $0x4] sm:$0xf]
        %v491 = vld [vmem:[%s488 + $0x8] sm:$0xf]
        %v492 = vld [vmem:[%s488 + $0xc] sm:$0xf]
        %v496 = vunpack.c.l.b16 %v485
        %v497 = vunpack.c.l.b16 %v486
        %v498 = vunpack.c.l.b16 %v487
        %v499 = vpack.c.b16 %v497, %v496
        %v500 = vpack.c.b16 %v498, %v498
        %vm501 = vsmask.f32 7424
        %v503 = vshrl.u32 %v499, 16
        %v505 = vshll.u32 %v499, 16
        %v507 = vrot.slane %v505, 1
        %v508 = vor.u32 %v503, %v507
        %v510 = vshll.u32 %v500, 16
        %v512 = vrot.slane %v510, 1
        %v513 = vsel %vm501, %v508, %v512
        %v518 = vunpack.c.l.b16 %v489
        %v519 = vunpack.c.l.b16 %v490
        %v520 = vunpack.c.l.b16 %v491
        %v521 = vunpack.c.l.b16 %v492
        %v522 = vpack.c.b16 %v519, %v518
        %v523 = vpack.c.b16 %v521, %v520
        %v527 = vsel %vm362, %v513, 0
        %529 = vmatprep.subr.bf16.mxu0 0
        %530 = vmatpush1.bf16.msra.mxu0 %v522
        %531 = vmatprep.subr.bf16.mxu0 0
        %532 = vmatpush1.bf16.msra.mxu0 %v523
        %533 = vmatprep.subr.bf16.mxu0 0
        %534 = vmatpush1.bf16.msra.mxu0 0
        %535 = vmatprep.subr.bf16.mxu0 0
        %536 = vmatpush1.bf16.msra.mxu0 0
        %537 = vmatprep.subr.bf16.mxu0 0
        %538 = vmatpush1.bf16.msra.mxu0 0
        %539 = vmatprep.subr.bf16.mxu0 0
        %540 = vmatpush1.bf16.msra.mxu0 0
        %541 = vmatprep.subr.bf16.mxu0 0
        %542 = vmatpush1.bf16.msra.mxu0 0
        %543 = vmatprep.subr.bf16.mxu0 0
        %544 = vmatpush1.bf16.msra.mxu0 0
        %545 = vmatprep.subr.bf16.mxu0 0
        %546 = vmatpush1.bf16.msra.mxu0 0
        %547 = vmatprep.subr.bf16.mxu0 0
        %548 = vmatpush1.bf16.msra.mxu0 0
        %549 = vmatprep.subr.bf16.mxu0 0
        %550 = vmatpush1.bf16.msra.mxu0 0
        %551 = vmatprep.subr.bf16.mxu0 0
        %552 = vmatpush1.bf16.msra.mxu0 0
        %553 = vmatprep.subr.bf16.mxu0 0
        %554 = vmatpush1.bf16.msra.mxu0 0
        %555 = vmatprep.subr.bf16.mxu0 0
        %556 = vmatpush1.bf16.msra.mxu0 0
        %557 = vmatprep.subr.bf16.mxu0 0
        %558 = vmatpush1.bf16.msra.mxu0 0
        %559 = vmatprep.subr.bf16.mxu0 0
        %560 = vmatpush1.bf16.msra.mxu0 0
        %561 = vmatprep.mubr.bf16.mxu0 0
        %562 = vmatmul.mubr.bf16.gmra.mrb[0].mxu0 %v527
        %v563 = vpop.f32.mrb[0].mxu0
        %v564 = vadd.f32 0.0, %v563
        %v565 = vpop.f32.mrb[0].mxu0
        %v566 = vpop.f32.mrb[0].mxu0
        %v567 = vadd.f32 0.0, %v566
        %v568 = vpop.f32.mrb[0].mxu0
        %569 = vdwg.mxu0
        %v570 = vadd.f32 %v479, %v564
        %v571 = vadd.f32 %v482, %v567
        %v572 = vld [vmem:[%s2] sm:$0x1]
        %v574 = vlaneseq
        %v575 = vshrl.u32 %v574, 7
        %v576 = vsub.s32 0, %v575
        %v577 = vrot.slane %v572, %v576
        %v579 = vadd.f32 %v570, %v577
        %v580 = vadd.f32 %v571, %v577
        %v581 = vmax.f32 %v579, 0.0
        %v582 = vmax.f32 %v580, 0.0
        %v583 = vsel %vm362, %v581, 0.0
        %584 = vadd.xlane.f32.xlu0 %v583
        %v585 = vpop.xlane.xlu0 %584
        %v586 = vsel %vm362, %v582, 0.0
        %587 = vadd.xlane.f32.xlu0 %v586
        %v588 = vpop.xlane.xlu0 %587
        %v589 = vrcp.pop 32.0
        %v590 = vmul.f32 %v585, %v589
        %v591 = vmul.f32 %v588, %v589
        %v592 = vmul.f32 %v581, %v581
        %v593 = vmul.f32 %v582, %v582
        %v594 = vsel %vm362, %v592, 0.0
        %595 = vadd.xlane.f32.xlu0 %v594
        %v596 = vpop.xlane.xlu0 %595
        %v597 = vsel %vm362, %v593, 0.0
        %598 = vadd.xlane.f32.xlu0 %v597
        %v599 = vpop.xlane.xlu0 %598
        %v600 = vmul.f32 %v596, %v589
        %v601 = vmul.f32 %v599, %v589
        %v602 = vmul.f32 %v590, %v590
        %v603 = vmul.f32 %v591, %v591
        %v604 = vsub.f32 %v600, %v602
        %v605 = vsub.f32 %v601, %v603
        %v606 = vmax.f32 %v604, 0.0
        %v607 = vmax.f32 %v605, 0.0
        %v608 = vsub.f32 %v581, %v590
        %v609 = vsub.f32 %v582, %v591
        %v610 = vadd.f32 %v606, 1e-05
        %v611 = vadd.f32 %v607, 1e-05
        %v612 = vrsqrt.pop %v610
        %v613 = vrsqrt.pop %v611
        %v614 = vmul.f32 %v608, %v612
        %v615 = vmul.f32 %v609, %v613
        %v616 = vld [vmem:[%s3] sm:$0x1]
        %v618 = vlaneseq
        %v619 = vshrl.u32 %v618, 7
        %v620 = vsub.s32 0, %v619
        %v621 = vrot.slane %v616, %v620
        %v623 = vmul.f32 %v614, %v621
        %v624 = vmul.f32 %v615, %v621
        %v625 = vld [vmem:[%s4] sm:$0x1]
        %v627 = vlaneseq
        %v628 = vshrl.u32 %v627, 7
        %v629 = vsub.s32 0, %v628
        %v630 = vrot.slane %v625, %v629
        %v632 = vadd.f32 %v623, %v630
        %v633 = vadd.f32 %v624, %v630
        %vm634 = vcmask 257024
        %635 = vst.msk [vmem:[#allocation2] sm:$0xf] %vm634, 0
        %vm636 = vcmask 261124
        %637 = vst.msk [vmem:[#allocation2 + $0x8] sm:$0xf0] %vm636, 0
        %v638 = vpack.c.bf16 %v633, %v632
        %v640 = vrot.slane %v638, 4
        %642 = vst.msk [vmem:[#allocation2] sm:$0xf0] %vm636, %v640
        %643 = vst.msk [vmem:[#allocation2 + $0x8] sm:$0xf] %vm634, %v640
        %v644 = vld [vmem:[#allocation2] sm:$0xf8]
        %v645 = vld [vmem:[#allocation2 + $0x8] sm:$0xf]
        %v646 = vld [vmem:[%s5] sm:$0xf]
        %v647 = vld [vmem:[%s5 + $0x4] sm:$0xf]
        %v648 = vld [vmem:[%s5 + $0x8] sm:$0xf]
        %v649 = vld [vmem:[%s5 + $0xc] sm:$0xf]
        %v650 = vld [vmem:[#allocation2] sm:$0xf0]
        %s651 = scalar_lea.vmem %s5, 16
        %v652 = vld [vmem:[%s651] sm:$0xf]
        %v653 = vld [vmem:[%s651 + $0x4] sm:$0xf]
        %v654 = vld [vmem:[%s651 + $0x8] sm:$0xf]
        %v655 = vld [vmem:[%s651 + $0xc] sm:$0xf]
        %vm658 = vcmask 1043456
        %v659 = vrot.slane %v650, 4
        %v660 = vrot.slane %v645, 4
        %v661 = vsel %vm658, %v659, %v660
        %v666 = vunpack.c.l.b16 %v652
        %v667 = vunpack.c.l.b16 %v653
        %v668 = vunpack.c.l.b16 %v654
        %v669 = vunpack.c.l.b16 %v655
        %v670 = vpack.c.b16 %v667, %v666
        %v671 = vpack.c.b16 %v669, %v668
        %v675 = vsel %vm362, %v661, 0
        %677 = vmatprep.subr.bf16.mxu0 0
        %678 = vmatpush1.bf16.msra.mxu0 %v670
        %679 = vmatprep.subr.bf16.mxu0 0
        %680 = vmatpush1.bf16.msra.mxu0 %v671
        %681 = vmatprep.subr.bf16.mxu0 0
        %682 = vmatpush1.bf16.msra.mxu0 0
        %683 = vmatprep.subr.bf16.mxu0 0
        %684 = vmatpush1.bf16.msra.mxu0 0
        %685 = vmatprep.subr.bf16.mxu0 0
        %686 = vmatpush1.bf16.msra.mxu0 0
        %687 = vmatprep.subr.bf16.mxu0 0
        %688 = vmatpush1.bf16.msra.mxu0 0
        %689 = vmatprep.subr.bf16.mxu0 0
        %690 = vmatpush1.bf16.msra.mxu0 0
        %691 = vmatprep.subr.bf16.mxu0 0
        %692 = vmatpush1.bf16.msra.mxu0 0
        %693 = vmatprep.subr.bf16.mxu0 0
        %694 = vmatpush1.bf16.msra.mxu0 0
        %695 = vmatprep.subr.bf16.mxu0 0
        %696 = vmatpush1.bf16.msra.mxu0 0
        %697 = vmatprep.subr.bf16.mxu0 0
        %698 = vmatpush1.bf16.msra.mxu0 0
        %699 = vmatprep.subr.bf16.mxu0 0
        %700 = vmatpush1.bf16.msra.mxu0 0
        %701 = vmatprep.subr.bf16.mxu0 0
        %702 = vmatpush1.bf16.msra.mxu0 0
        %703 = vmatprep.subr.bf16.mxu0 0
        %704 = vmatpush1.bf16.msra.mxu0 0
        %705 = vmatprep.subr.bf16.mxu0 0
        %706 = vmatpush1.bf16.msra.mxu0 0
        %707 = vmatprep.subr.bf16.mxu0 0
        %708 = vmatpush1.bf16.msra.mxu0 0
        %709 = vmatprep.mubr.bf16.mxu0 0
        %710 = vmatmul.mubr.bf16.gmra.mrb[0].mxu0 %v675
        %v711 = vpop.f32.mrb[0].mxu0
        %v712 = vadd.f32 0.0, %v711
        %v713 = vpop.f32.mrb[0].mxu0
        %v714 = vpop.f32.mrb[0].mxu0
        %v715 = vadd.f32 0.0, %v714
        %v716 = vpop.f32.mrb[0].mxu0
        %717 = vdwg.mxu0
        %v719 = vshrl.u32 %v644, 16
        %v721 = vrot.slane %v719, 3
        %v722 = vshll.u32 %v644, 16
        %v724 = vrot.slane %v722, 4
        %v725 = vor.u32 %v721, %v724
        %v727 = vshrl.u32 %v645, 16
        %v729 = vrot.slane %v727, 3
        %v730 = vshll.u32 %v645, 16
        %v732 = vrot.slane %v730, 4
        %v733 = vor.u32 %v729, %v732
        %v734 = vsel %vm411, %v725, %v733
        %v739 = vunpack.c.l.b16 %v646
        %v740 = vunpack.c.l.b16 %v647
        %v741 = vunpack.c.l.b16 %v648
        %v742 = vunpack.c.l.b16 %v649
        %v743 = vpack.c.b16 %v740, %v739
        %v744 = vpack.c.b16 %v742, %v741
        %v748 = vsel %vm362, %v734, 0
        %750 = vmatprep.subr.bf16.mxu0 0
        %751 = vmatpush1.bf16.msra.mxu0 %v743
        %752 = vmatprep.subr.bf16.mxu0 0
        %753 = vmatpush1.bf16.msra.mxu0 %v744
        %754 = vmatprep.subr.bf16.mxu0 0
        %755 = vmatpush1.bf16.msra.mxu0 0
        %756 = vmatprep.subr.bf16.mxu0 0
        %757 = vmatpush1.bf16.msra.mxu0 0
        %758 = vmatprep.subr.bf16.mxu0 0
        %759 = vmatpush1.bf16.msra.mxu0 0
        %760 = vmatprep.subr.bf16.mxu0 0
        %761 = vmatpush1.bf16.msra.mxu0 0
        %762 = vmatprep.subr.bf16.mxu0 0
        %763 = vmatpush1.bf16.msra.mxu0 0
        %764 = vmatprep.subr.bf16.mxu0 0
        %765 = vmatpush1.bf16.msra.mxu0 0
        %766 = vmatprep.subr.bf16.mxu0 0
        %767 = vmatpush1.bf16.msra.mxu0 0
        %768 = vmatprep.subr.bf16.mxu0 0
        %769 = vmatpush1.bf16.msra.mxu0 0
        %770 = vmatprep.subr.bf16.mxu0 0
        %771 = vmatpush1.bf16.msra.mxu0 0
        %772 = vmatprep.subr.bf16.mxu0 0
        %773 = vmatpush1.bf16.msra.mxu0 0
        %774 = vmatprep.subr.bf16.mxu0 0
        %775 = vmatpush1.bf16.msra.mxu0 0
        %776 = vmatprep.subr.bf16.mxu0 0
        %777 = vmatpush1.bf16.msra.mxu0 0
        %778 = vmatprep.subr.bf16.mxu0 0
        %779 = vmatpush1.bf16.msra.mxu0 0
        %780 = vmatprep.subr.bf16.mxu0 0
        %781 = vmatpush1.bf16.msra.mxu0 0
        %782 = vmatprep.mubr.bf16.mxu0 0
        %783 = vmatmul.mubr.bf16.gmra.mrb[0].mxu0 %v748
        %v784 = vpop.f32.mrb[0].mxu0
        %v785 = vadd.f32 %v712, %v784
        %v786 = vpop.f32.mrb[0].mxu0
        %v787 = vpop.f32.mrb[0].mxu0
        %v788 = vadd.f32 %v715, %v787
        %v789 = vpop.f32.mrb[0].mxu0
        %790 = vdwg.mxu0
        %v791 = vld [vmem:[#allocation2 + $0x8] sm:$0x1f]
        %s792 = scalar_lea.vmem %s5, 32
        %v793 = vld [vmem:[%s792] sm:$0xf]
        %v794 = vld [vmem:[%s792 + $0x4] sm:$0xf]
        %v795 = vld [vmem:[%s792 + $0x8] sm:$0xf]
        %v796 = vld [vmem:[%s792 + $0xc] sm:$0xf]
        %vm797 = vsmask.f32 3328
        %v799 = vshrl.u32 %v650, 16
        %v801 = vrot.slane %v799, 4
        %v802 = vshll.u32 %v650, 16
        %v804 = vrot.slane %v802, 5
        %v805 = vor.u32 %v801, %v804
        %v807 = vshrl.u32 %v791, 16
        %v809 = vrot.slane %v807, 4
        %v810 = vshll.u32 %v791, 16
        %v812 = vrot.slane %v810, 5
        %v813 = vor.u32 %v809, %v812
        %v814 = vsel %vm797, %v805, %v813
        %v819 = vunpack.c.l.b16 %v793
        %v820 = vunpack.c.l.b16 %v794
        %v821 = vunpack.c.l.b16 %v795
        %v822 = vunpack.c.l.b16 %v796
        %v823 = vpack.c.b16 %v820, %v819
        %v824 = vpack.c.b16 %v822, %v821
        %v828 = vsel %vm362, %v814, 0
        %830 = vmatprep.subr.bf16.mxu0 0
        %831 = vmatpush1.bf16.msra.mxu0 %v823
        %832 = vmatprep.subr.bf16.mxu0 0
        %833 = vmatpush1.bf16.msra.mxu0 %v824
        %834 = vmatprep.subr.bf16.mxu0 0
        %835 = vmatpush1.bf16.msra.mxu0 0
        %836 = vmatprep.subr.bf16.mxu0 0
        %837 = vmatpush1.bf16.msra.mxu0 0
        %838 = vmatprep.subr.bf16.mxu0 0
        %839 = vmatpush1.bf16.msra.mxu0 0
        %840 = vmatprep.subr.bf16.mxu0 0
        %841 = vmatpush1.bf16.msra.mxu0 0
        %842 = vmatprep.subr.bf16.mxu0 0
        %843 = vmatpush1.bf16.msra.mxu0 0
        %844 = vmatprep.subr.bf16.mxu0 0
        %845 = vmatpush1.bf16.msra.mxu0 0
        %846 = vmatprep.subr.bf16.mxu0 0
        %847 = vmatpush1.bf16.msra.mxu0 0
        %848 = vmatprep.subr.bf16.mxu0 0
        %849 = vmatpush1.bf16.msra.mxu0 0
        %850 = vmatprep.subr.bf16.mxu0 0
        %851 = vmatpush1.bf16.msra.mxu0 0
        %852 = vmatprep.subr.bf16.mxu0 0
        %853 = vmatpush1.bf16.msra.mxu0 0
        %854 = vmatprep.subr.bf16.mxu0 0
        %855 = vmatpush1.bf16.msra.mxu0 0
        %856 = vmatprep.subr.bf16.mxu0 0
        %857 = vmatpush1.bf16.msra.mxu0 0
        %858 = vmatprep.subr.bf16.mxu0 0
        %859 = vmatpush1.bf16.msra.mxu0 0
        %860 = vmatprep.subr.bf16.mxu0 0
        %861 = vmatpush1.bf16.msra.mxu0 0
        %862 = vmatprep.mubr.bf16.mxu0 0
        %863 = vmatmul.mubr.bf16.gmra.mrb[0].mxu0 %v828
        %v864 = vpop.f32.mrb[0].mxu0
        %v865 = vadd.f32 0.0, %v864
        %v866 = vpop.f32.mrb[0].mxu0
        %v867 = vpop.f32.mrb[0].mxu0
        %v868 = vadd.f32 0.0, %v867
        %v869 = vpop.f32.mrb[0].mxu0
        %870 = vdwg.mxu0
        %v871 = vadd.f32 %v785, %v865
        %v872 = vadd.f32 %v788, %v868
        %v873 = vld [vmem:[%s6] sm:$0x1]
        %v875 = vlaneseq
        %v876 = vshrl.u32 %v875, 7
        %v877 = vsub.s32 0, %v876
        %v878 = vrot.slane %v873, %v877
        %v880 = vadd.f32 %v871, %v878
        %v881 = vadd.f32 %v872, %v878
        %v882 = vmax.f32 %v880, 0.0
        %v883 = vmax.f32 %v881, 0.0
        %v884 = vsel %vm362, %v882, 0.0
        %885 = vadd.xlane.f32.xlu0 %v884
        %v886 = vpop.xlane.xlu0 %885
        %v887 = vsel %vm362, %v883, 0.0
        %888 = vadd.xlane.f32.xlu0 %v887
        %v889 = vpop.xlane.xlu0 %888
        %v890 = vmul.f32 %v886, %v589
        %v891 = vmul.f32 %v889, %v589
        %v892 = vmul.f32 %v882, %v882
        %v893 = vmul.f32 %v883, %v883
        %v894 = vsel %vm362, %v892, 0.0
        %895 = vadd.xlane.f32.xlu0 %v894
        %v896 = vpop.xlane.xlu0 %895
        %v897 = vsel %vm362, %v893, 0.0
        %898 = vadd.xlane.f32.xlu0 %v897
        %v899 = vpop.xlane.xlu0 %898
        %v900 = vmul.f32 %v896, %v589
        %v901 = vmul.f32 %v899, %v589
        %v902 = vmul.f32 %v890, %v890
        %v903 = vmul.f32 %v891, %v891
        %v904 = vsub.f32 %v900, %v902
        %v905 = vsub.f32 %v901, %v903
        %v906 = vmax.f32 %v904, 0.0
        %v907 = vmax.f32 %v905, 0.0
        %v908 = vsub.f32 %v882, %v890
        %v909 = vsub.f32 %v883, %v891
        %v910 = vadd.f32 %v906, 1e-05
        %v911 = vadd.f32 %v907, 1e-05
        %v912 = vrsqrt.pop %v910
        %v913 = vrsqrt.pop %v911
        %v914 = vmul.f32 %v908, %v912
        %v915 = vmul.f32 %v909, %v913
        %v916 = vld [vmem:[%s7] sm:$0x1]
        %v918 = vlaneseq
        %v919 = vshrl.u32 %v918, 7
        %v920 = vsub.s32 0, %v919
        %v921 = vrot.slane %v916, %v920
        %v923 = vmul.f32 %v914, %v921
        %v924 = vmul.f32 %v915, %v921
        %v925 = vsel %vm362, %v923, 0.0
        %926 = vadd.xlane.f32.xlu0 %v925
        %v927 = vpop.xlane.xlu0 %926
        %v928 = vsel %vm362, %v924, 0.0
        %929 = vadd.xlane.f32.xlu0 %v928
        %v930 = vpop.xlane.xlu0 %929
        %v931 = vld [vmem:[#allocation3] sm:$0x1]
        %s932 = vtos %v931
        %v933 = vstv %s932
        %v934 = vadd.f32 %v927, %v933
        %v935 = vadd.f32 %v930, %v933
        %v938 = vlaneseq
        %v939 = vand.u32 %v938, 127
        %v940 = vlaneseq
        %v941 = vshrl.u32 %v940, 7
        %v942 = vsub.s32 %v939, %v941
        %v943 = vrot.slane %v934, %v942
        %v944 = vadd.s32 %v939, 4294967288
        %v945 = vlaneseq
        %v946 = vshrl.u32 %v945, 7
        %v947 = vsub.s32 %v944, %v946
        %v948 = vrot.slane %v935, %v947
        %vm949 = vcmask 130112
        %v950 = vsel %vm949, %v948, %v943
        %vm952 = vcmask 122880
        %953 = vst.msk [vmem:[%s326] sm:$0x1] %vm952, %v950
        %s954 = sand.u32 %s227, 1
        %s955 = scalar_lea.sflag [#allocation5], %s954
        %s956 = sand.u32 %s227, 1
        %s957 = scalar_lea.vmem [#allocation4], %s956
        // Predicated region
        $region57: #{predictor_forward.1} parent=55 // pred_check
          %p958 = pneg %p237
        $region58: #{predictor_forward.1} parent=55 // pred_check_branch
          %960 = sbr.rel (%p958) target = $region60
        $region59: #{predictor_forward.1} parent=55 // pred_region
          %s962 = ssub.s32 16, 16
          %963 = vsyncadd %s955, %s962
          %s964 = smul.addr %s25, 16
          %s965 = scalar_lea.hbm %s9, %s964
          %s967 = sshll.u32 %s957, 4
          %s968 = int_to_ptr.vmem [resolvable:$true] %s967
          %970 = dma.vmem_to_hbm [thread:$0]  %s968, 16, %s965, %s955
        $region60: #{predictor_forward.1} parent=55 // pred_fallthru
          _
      $region56: #{predictor_forward.1} parent=5 // pred_fallthru
        _
      %p971 = scmp.le.s32.totalorder 2, %s20
      // Predicated region
      $region61: #{predictor_forward.1} parent=5 // pred_check
        %p972 = pneg %p971
      $region62: #{predictor_forward.1} parent=5 // pred_check_branch
        %974 = sbr.rel (%p972) target = $region64
      $region63: #{predictor_forward.1} parent=5 // pred_region
        %s975 = ssub.s32 %s20, 2
        // Predicated region
        $region65: #{predictor_forward.1} parent=63 // pred_check
          %p976 = pneg %p243
        $region66: #{predictor_forward.1} parent=63 // pred_check_branch
          %978 = sbr.rel (%p976) target = $region68
        $region67: #{predictor_forward.1} parent=63 // pred_region
          %s979 = sand.u32 %s228, 1
          %s980 = scalar_lea.sflag [#allocation5], %s979
          %s981 = sand.u32 %s228, 1
          %s982 = scalar_lea.vmem [#allocation4], %s981
          %983 = dma.done %s980, 16
        $region68: #{predictor_forward.1} parent=63 // pred_fallthru
          _
      $region64: #{predictor_forward.1} parent=5 // pred_fallthru
        _
    $region6: #{predictor_forward.1} parent=1 // loop_footer
      %s24 = sadd.s32 1, %s20
    $region7: #{predictor_forward.1} parent=1 // loop_footer_branch
      %19 = sbr.rel target = $region3
    $region8: #{predictor_forward.1} parent=1 // loop_exit
      _
    %984 = vsyncpa [#allocation5], 1
    %s985 = scalar_lea.sflag [#allocation5], 1
    %986 = vsyncpa %s985, 1

</llo_original>
